<compile_context>
chip_gen: v7x
topology: tpu7x:2x2x1
jax: 0.10.0
libtpu: 0.0.40
codegen_flags: <defaults>
</compile_context>

<pallas_src>
import functools

import jax
import jax.numpy as jnp
from jax.experimental import pallas as pl
from jax.experimental.pallas import tpu as pltpu


# Padded feature dims (sublane / lane friendly).
_IN_PAD = 8      # 4   -> 8   (kept at 8: proven K=8 MXU path, input is tiny)
_H1_PAD = 128    # 100 -> 128
_H2_PAD = 64     # 50  -> 64  (v3: was 128)
_W3_ROWS = 8     # matmul M padded to 8 sublanes
_OUT_ROWS = 2    # only mu/sigma rows go back to HBM


def _mlp_kernel(x_ref, w1_ref, w2_ref, w3_ref, o_ref):
    # Batch lives on the LANE axis: loads, intermediates and the store are
    # lane-dense (tile width is a multiple of 256 lanes).
    w1 = w1_ref[...]                                               # (128, 8)
    xt = x_ref[...].astype(w1.dtype)                               # (8, TB)
    h1 = jnp.maximum(
        jnp.dot(w1, xt, preferred_element_type=jnp.float32), 0.0
    )                                                              # (128, TB) f32
    w2 = w2_ref[...]                                               # (64, 128)
    h2 = jnp.maximum(
        jnp.dot(w2, h1.astype(w2.dtype), preferred_element_type=jnp.float32), 0.0
    )                                                              # (64, TB) f32
    w3 = w3_ref[...]                                               # (8, 64)
    o = jnp.dot(w3, h2.astype(w3.dtype), preferred_element_type=jnp.float32)  # (8, TB)
    # Keep the padded-M matmul result in-register; store only the 2 real rows.
    o_ref[...] = jnp.tanh(o[0:_OUT_ROWS, :])                       # (2, TB) lane-dense store


def prepare_params(W1, W2, W3, use_bf16=False):
    """Zero-pad PyTorch-convention (out, in) weights once to vreg-friendly shapes.

    use_bf16=True pre-casts weights to bf16 (MXU-friendly, ~1e-3 error vs the
    f32 reference; keep False if the 1e-5 tolerance must hold).
    """
    W1p = jnp.zeros((_H1_PAD, _IN_PAD), jnp.float32).at[:100, :4].set(W1)
    W2p = jnp.zeros((_H2_PAD, _H1_PAD), jnp.float32).at[:50, :100].set(W2)
    W3p = jnp.zeros((_W3_ROWS, _H2_PAD), jnp.float32).at[:2, :50].set(W3)
    if use_bf16:
        W1p, W2p, W3p = (w.astype(jnp.bfloat16) for w in (W1p, W2p, W3p))
    return W1p, W2p, W3p


def _cdiv(a, b):
    return (a + b - 1) // b


def _round_up(n, m):
    return ((n + m - 1) // m) * m


def _choose_tiling(B, max_tile_b, min_grid_steps):
    """Even split of the (padded) batch into lane tiles that are multiples of 256."""
    n_tiles = max(_cdiv(B, max_tile_b), 1)
    if B >= 256 * min_grid_steps:
        # Guarantee >= min_grid_steps tiles so "parallel" shards across both
        # TensorCores on v7x; negligible extra cost on single-TC chips.
        n_tiles = max(n_tiles, min_grid_steps)
    tile_b = _round_up(_cdiv(B, n_tiles), 256)
    return tile_b, tile_b * n_tiles


@functools.partial(jax.jit, static_argnames=("max_tile_b", "min_grid_steps"))
def conditional_normal_forward(x, W1p, W2p, W3p, max_tile_b=4096, min_grid_steps=2):
    """x: (B, 4) f32.  Returns (mu, sigma) each (B, 1), matching the PyTorch module."""
    assert max_tile_b % 256 == 0
    B = x.shape[0]
    tile_b, b_pad = _choose_tiling(B, max_tile_b, min_grid_steps)

    # Batch on lanes: (B, 4) -> zero-padded (8, b_pad) transpose, staged in the
    # weight dtype (bf16 path halves the staged-input bytes too).
    xt = jnp.zeros((_IN_PAD, b_pad), W1p.dtype).at[:4, :B].set(x.T.astype(W1p.dtype))

    out = pl.pallas_call(
        _mlp_kernel,
        out_shape=jax.ShapeDtypeStruct((_OUT_ROWS, b_pad), jnp.float32),
        grid=(b_pad // tile_b,),
        in_specs=[
            pl.BlockSpec((_IN_PAD, tile_b), lambda i: (0, i)),      # x tile marches over lanes
            pl.BlockSpec((_H1_PAD, _IN_PAD), lambda i: (0, 0)),     # weights stay VMEM-resident
            pl.BlockSpec((_H2_PAD, _H1_PAD), lambda i: (0, 0)),
            pl.BlockSpec((_W3_ROWS, _H2_PAD), lambda i: (0, 0)),
        ],
        out_specs=pl.BlockSpec((_OUT_ROWS, tile_b), lambda i: (0, i)),
        compiler_params=pltpu.CompilerParams(
            dimension_semantics=("parallel",)                       # shards batch tiles across TCs (v7x)
        ),
    )(xt, W1p, W2p, W3p)

    mu = out[0, :B].reshape(B, 1)
    sigma = out[1, :B].reshape(B, 1) + 1.0
    return mu, sigma


def _init_linear_weight(key, out_features, in_features):
    # Mimic torch.nn.Linear default init: U(-1/sqrt(in), 1/sqrt(in)), shape (out, in).
    bound = 1.0 / jnp.sqrt(jnp.float32(in_features))
    return jax.random.uniform(
        key, (out_features, in_features), jnp.float32, minval=-bound, maxval=bound
    )


if __name__ == "__main__":
    key = jax.random.PRNGKey(0)
    kx, k1, k2, k3 = jax.random.split(key, 4)

    B = 8
    x = jax.random.normal(kx, (B, 4), jnp.float32)

    # Parameters in PyTorch (out, in) convention.
    W1 = _init_linear_weight(k1, 100, 4)
    W2 = _init_linear_weight(k2, 50, 100)
    W3 = _init_linear_weight(k3, 2, 50)

    # Pad weights once (init-time), then run the kernel (f32 path => 1e-5 holds).
    W1p, W2p, W3p = prepare_params(W1, W2, W3, use_bf16=False)
    mu, sig = conditional_normal_forward(x, W1p, W2p, W3p)
    jax.block_until_ready((mu, sig))

    # Pure-JAX reference check.
    o1 = jnp.maximum(x @ W1.T, 0.0)
    o2 = jnp.maximum(o1 @ W2.T, 0.0)
    o = jnp.tanh(o2 @ W3.T)
    mu_ref = o[:, 0:1]
    sig_ref = o[:, 1:2] + 1.0
    assert mu.shape == (B, 1) and sig.shape == (B, 1)
    assert jnp.allclose(mu, mu_ref, atol=1e-5), "mu mismatch"
    assert jnp.allclose(sig, sig_ref, atol=1e-5), "sigma mismatch"

    print("KERNEL_OK")
</pallas_src>

<mosaic_0001>
module attributes {stable_mosaic.version = 11 : i64} {
  func.func @_mlp_kernel(%arg0: i32, %arg1: memref<8x256xf32, #tpu.memory_space<vmem>>, %arg2: memref<128x8xf32, #tpu.memory_space<vmem>>, %arg3: memref<64x128xf32, #tpu.memory_space<vmem>>, %arg4: memref<8x64xf32, #tpu.memory_space<vmem>>, %arg5: memref<2x256xf32, #tpu.memory_space<vmem>>) attributes {dimension_semantics = [#tpu.dimension_semantics<parallel>], iteration_bounds = array<i64: 1>, scalar_prefetch = 0 : i64, scratch_operands = 0 : i64, tpu.core_type = #tpu.core_type<tc>, window_params = [{transform_indices = @transform_0, window_bounds = array<i64: 8, 256>}, {pipeline_mode = #tpu.pipeline_mode<synchronous>, transform_indices = @transform_1, window_bounds = array<i64: 128, 8>}, {pipeline_mode = #tpu.pipeline_mode<synchronous>, transform_indices = @transform_2, window_bounds = array<i64: 64, 128>}, {pipeline_mode = #tpu.pipeline_mode<synchronous>, transform_indices = @transform_3, window_bounds = array<i64: 8, 64>}, {transform_indices = @transform_4, window_bounds = array<i64: 2, 256>}]} {
    %c0 = arith.constant 0 : index
    %c0_0 = arith.constant 0 : index
    %0 = vector.load %arg2[%c0, %c0_0] : memref<128x8xf32, #tpu.memory_space<vmem>>, vector<128x8xf32>
    %c0_1 = arith.constant 0 : index
    %c0_2 = arith.constant 0 : index
    %1 = vector.load %arg1[%c0_1, %c0_2] : memref<8x256xf32, #tpu.memory_space<vmem>>, vector<8x256xf32>
    %cst = arith.constant dense<0.000000e+00> : vector<128x256xf32>
    %2 = tpu.matmul %0, %1, %cst {dimension_numbers = #tpu.dot_dimension_numbers<[1], [0], [0], [1], [0, 0, 1, 1], [], []>} : vector<128x8xf32>, vector<8x256xf32>, vector<128x256xf32> -> vector<128x256xf32>
    %cst_3 = arith.constant 0.000000e+00 : f32
    %3 = vector.broadcast %cst_3 : f32 to vector<128x256xf32>
    %4 = arith.maximumf %2, %3 : vector<128x256xf32>
    %c0_4 = arith.constant 0 : index
    %c0_5 = arith.constant 0 : index
    %5 = vector.load %arg3[%c0_4, %c0_5] : memref<64x128xf32, #tpu.memory_space<vmem>>, vector<64x128xf32>
    %cst_6 = arith.constant dense<0.000000e+00> : vector<64x256xf32>
    %6 = tpu.matmul %5, %4, %cst_6 {dimension_numbers = #tpu.dot_dimension_numbers<[1], [0], [0], [1], [0, 0, 1, 1], [], []>} : vector<64x128xf32>, vector<128x256xf32>, vector<64x256xf32> -> vector<64x256xf32>
    %cst_7 = arith.constant 0.000000e+00 : f32
    %7 = vector.broadcast %cst_7 : f32 to vector<64x256xf32>
    %8 = arith.maximumf %6, %7 : vector<64x256xf32>
    %c0_8 = arith.constant 0 : index
    %c0_9 = arith.constant 0 : index
    %9 = vector.load %arg4[%c0_8, %c0_9] : memref<8x64xf32, #tpu.memory_space<vmem>>, vector<8x64xf32>
    %cst_10 = arith.constant dense<0.000000e+00> : vector<8x256xf32>
    %10 = tpu.matmul %9, %8, %cst_10 {dimension_numbers = #tpu.dot_dimension_numbers<[1], [0], [0], [1], [0, 0, 1, 1], [], []>} : vector<8x64xf32>, vector<64x256xf32>, vector<8x256xf32> -> vector<8x256xf32>
    %11 = vector.extract_strided_slice %10 {offsets = [0, 0], sizes = [2, 256], strides = [1, 1]} : vector<8x256xf32> to vector<2x256xf32>
    %12 = math.tanh %11 : vector<2x256xf32>
    %c0_11 = arith.constant 0 : index
    %c0_12 = arith.constant 0 : index
    %13 = vector.load %arg5[%c0_11, %c0_12] : memref<2x256xf32, #tpu.memory_space<vmem>>, vector<2x256xf32>
    tpu.vector_store %arg5[%c0_11, %c0_12], %12 {strides = array<i32>} : memref<2x256xf32, #tpu.memory_space<vmem>>, vector<2x256xf32>,
    return
  }
  func.func @transform_0(%arg0: i32) -> (i32, i32) {
    %c0_i32 = arith.constant 0 : i32
    %c0_i32_0 = arith.constant 0 : i32
    return %c0_i32, %arg0 : i32, i32
  }
  func.func @transform_1(%arg0: i32) -> (i32, i32) {
    %c0_i32 = arith.constant 0 : i32
    %c0_i32_0 = arith.constant 0 : i32
    %c0_i32_1 = arith.constant 0 : i32
    return %c0_i32, %c0_i32_0 : i32, i32
  }
  func.func @transform_2(%arg0: i32) -> (i32, i32) {
    %c0_i32 = arith.constant 0 : i32
    %c0_i32_0 = arith.constant 0 : i32
    %c0_i32_1 = arith.constant 0 : i32
    return %c0_i32, %c0_i32_0 : i32, i32
  }
  func.func @transform_3(%arg0: i32) -> (i32, i32) {
    %c0_i32 = arith.constant 0 : i32
    %c0_i32_0 = arith.constant 0 : i32
    %c0_i32_1 = arith.constant 0 : i32
    return %c0_i32, %c0_i32_0 : i32, i32
  }
  func.func @transform_4(%arg0: i32) -> (i32, i32) {
    %c0_i32 = arith.constant 0 : i32
    %c0_i32_0 = arith.constant 0 : i32
    return %c0_i32, %arg0 : i32, i32
  }
}

</mosaic_0001>

<llo_original>
// kernel: conditional_normal_forward.1
$region0: #{conditional_normal_forward.1}
  #allocation0 [shape = 'u32[]', space=smem, size = 0x4, offset = 0x4, fixed_abs, tag = 'smem constant byte address 0x4 - core index']
  #allocation1 [shape = 'u32[144,128]{1,0:T(1,128)}', space=vmem, size = 0x12000, scoped, tag = 'internal scratch']
  %s0 = inlined_call_operand.vmem [shape: f32[8,256], index: 0, kind: input, shape index: {}]
  %s1 = inlined_call_operand.vmem [shape: f32[128,8], index: 1, kind: input, shape index: {}]
  %s2 = inlined_call_operand.vmem [shape: f32[64,128], index: 2, kind: input, shape index: {}]
  %s3 = inlined_call_operand.vmem [shape: f32[8,64], index: 3, kind: input, shape index: {}]
  %s4 = inlined_call_operand.vmem [shape: f32[2,256], index: 4, kind: output, shape index: {}]
  %s5 = sld [smem:[#allocation0]]
  $region26: #{conditional_normal_forward.1} parent=0
    _
  %s7 = ssub.s32 1, %s5
  %s8 = scalar_select 0, %s7, %s5
  // Predicated region
  $region2: #{conditional_normal_forward.1} parent=0 // pred_check
    _
  $region3: #{conditional_normal_forward.1} parent=0 // pred_check_branch
    %10 = sbr.rel (0) target = $region5
  $region4: #{conditional_normal_forward.1} parent=0 // pred_region
    _
  $region5: #{conditional_normal_forward.1} parent=0 // pred_fallthru
    _
  // Predicated region
  $region6: #{conditional_normal_forward.1} parent=0 // pred_check
    _
  $region7: #{conditional_normal_forward.1} parent=0 // pred_check_branch
    %12 = sbr.rel (0) target = $region9
  $region8: #{conditional_normal_forward.1} parent=0 // pred_region
    _
  $region9: #{conditional_normal_forward.1} parent=0 // pred_fallthru
    _
  // Predicated region
  $region10: #{conditional_normal_forward.1} parent=0 // pred_check
    _
  $region11: #{conditional_normal_forward.1} parent=0 // pred_check_branch
    %14 = sbr.rel (0) target = $region13
  $region12: #{conditional_normal_forward.1} parent=0 // pred_region
    _
  $region13: #{conditional_normal_forward.1} parent=0 // pred_fallthru
    _
  // Predicated region
  $region14: #{conditional_normal_forward.1} parent=0 // pred_check
    _
  $region15: #{conditional_normal_forward.1} parent=0 // pred_check_branch
    %16 = sbr.rel (0) target = $region17
  $region16: #{conditional_normal_forward.1} parent=0 // pred_region
    _
  $region17: #{conditional_normal_forward.1} parent=0 // pred_fallthru
    _
  %v17 = vld [vmem:[%s1] sm:$0xff]
  %v18 = vld [vmem:[%s1 + $0x8] sm:$0xff]
  %v19 = vld [vmem:[%s1 + $0x10] sm:$0xff]
  %v20 = vld [vmem:[%s1 + $0x18] sm:$0xff]
  %v21 = vld [vmem:[%s1 + $0x20] sm:$0xff]
  %v22 = vld [vmem:[%s1 + $0x28] sm:$0xff]
  %v23 = vld [vmem:[%s1 + $0x30] sm:$0xff]
  %v24 = vld [vmem:[%s1 + $0x38] sm:$0xff]
  %v25 = vld [vmem:[%s1 + $0x40] sm:$0xff]
  %v26 = vld [vmem:[%s1 + $0x48] sm:$0xff]
  %v27 = vld [vmem:[%s1 + $0x50] sm:$0xff]
  %v28 = vld [vmem:[%s1 + $0x58] sm:$0xff]
  %v29 = vld [vmem:[%s1 + $0x60] sm:$0xff]
  %v30 = vld [vmem:[%s1 + $0x68] sm:$0xff]
  %v31 = vld [vmem:[%s1 + $0x70] sm:$0xff]
  %v32 = vld [vmem:[%s1 + $0x78] sm:$0xff]
  %v33 = vld [vmem:[%s0] sm:$0xff]
  %v34 = vld [vmem:[%s0 + $0x8] sm:$0xff]
  %vm35 = vcmask 64512
  %v37 = vsel %vm35, %v17, 0
  %v40 = vsel %vm35, %v18, 0
  %v43 = vsel %vm35, %v19, 0
  %v46 = vsel %vm35, %v20, 0
  %v49 = vsel %vm35, %v21, 0
  %v52 = vsel %vm35, %v22, 0
  %v55 = vsel %vm35, %v23, 0
  %v58 = vsel %vm35, %v24, 0
  %v61 = vsel %vm35, %v25, 0
  %v64 = vsel %vm35, %v26, 0
  %v67 = vsel %vm35, %v27, 0
  %v70 = vsel %vm35, %v28, 0
  %v73 = vsel %vm35, %v29, 0
  %v76 = vsel %vm35, %v30, 0
  %v79 = vsel %vm35, %v31, 0
  %v82 = vsel %vm35, %v32, 0
  %84 = vmatprep.subr.mxu0 %v34
  %85 = vmatpush1.msra.mxu0 %v33
  %86 = vmatprep.subr.mxu0 0.0
  %87 = vmatpush1.msra.mxu0 0.0
  %88 = vmatprep.subr.mxu0 0.0
  %89 = vmatpush1.msra.mxu0 0.0
  %90 = vmatprep.subr.mxu0 0.0
  %91 = vmatpush1.msra.mxu0 0.0
  %92 = vmatprep.subr.mxu0 0.0
  %93 = vmatpush1.msra.mxu0 0.0
  %94 = vmatprep.subr.mxu0 0.0
  %95 = vmatpush1.msra.mxu0 0.0
  %96 = vmatprep.subr.mxu0 0.0
  %97 = vmatpush1.msra.mxu0 0.0
  %98 = vmatprep.subr.mxu0 0.0
  %99 = vmatpush1.msra.mxu0 0.0
  %100 = vmatprep.subr.mxu0 0.0
  %101 = vmatpush1.msra.mxu0 0.0
  %102 = vmatprep.subr.mxu0 0.0
  %103 = vmatpush1.msra.mxu0 0.0
  %104 = vmatprep.subr.mxu0 0.0
  %105 = vmatpush1.msra.mxu0 0.0
  %106 = vmatprep.subr.mxu0 0.0
  %107 = vmatpush1.msra.mxu0 0.0
  %108 = vmatprep.subr.mxu0 0.0
  %109 = vmatpush1.msra.mxu0 0.0
  %110 = vmatprep.subr.mxu0 0.0
  %111 = vmatpush1.msra.mxu0 0.0
  %112 = vmatprep.subr.mxu0 0.0
  %113 = vmatpush1.msra.mxu0 0.0
  %114 = vmatprep.subr.mxu0 0.0
  %115 = vmatpush1.msra.mxu0 0.0
  %116 = vmatprep.subr.mxu0 0.0
  %117 = vmatpush1.msra.mxu0 0.0
  %118 = vmatprep.subr.mxu0 0.0
  %119 = vmatpush1.msra.mxu0 0.0
  %120 = vmatprep.subr.mxu0 0.0
  %121 = vmatpush1.msra.mxu0 0.0
  %122 = vmatprep.subr.mxu0 0.0
  %123 = vmatpush1.msra.mxu0 0.0
  %124 = vmatprep.subr.mxu0 0.0
  %125 = vmatpush1.msra.mxu0 0.0
  %126 = vmatprep.subr.mxu0 0.0
  %127 = vmatpush1.msra.mxu0 0.0
  %128 = vmatprep.subr.mxu0 0.0
  %129 = vmatpush1.msra.mxu0 0.0
  %130 = vmatprep.subr.mxu0 0.0
  %131 = vmatpush1.msra.mxu0 0.0
  %132 = vmatprep.subr.mxu0 0.0
  %133 = vmatpush1.msra.mxu0 0.0
  %134 = vmatprep.subr.mxu0 0.0
  %135 = vmatpush1.msra.mxu0 0.0
  %136 = vmatprep.subr.mxu0 0.0
  %137 = vmatpush1.msra.mxu0 0.0
  %138 = vmatprep.subr.mxu0 0.0
  %139 = vmatpush1.msra.mxu0 0.0
  %140 = vmatprep.subr.mxu0 0.0
  %141 = vmatpush1.msra.mxu0 0.0
  %142 = vmatprep.subr.mxu0 0.0
  %143 = vmatpush1.msra.mxu0 0.0
  %144 = vmatprep.subr.mxu0 0.0
  %145 = vmatpush1.msra.mxu0 0.0
  %146 = vmatprep.subr.mxu0 0.0
  %147 = vmatpush1.msra.mxu0 0.0
  %148 = vmatprep.mubr.f32.mxu0 0.0
  %149 = vmatmul.mubr.f32.gmra.mrb[0].mxu0 %v37
  %v150 = vpop.f32.mrb[0].mxu0
  %v151 = vadd.f32 0.0, %v150
  %v152 = vpop.f32.mrb[0].mxu0
  %v153 = vadd.f32 0.0, %v152
  %154 = vmatprep.mubr.f32.mxu0 0.0
  %155 = vmatmul.mubr.f32.gmra.mrb[0].mxu0 %v40
  %v156 = vpop.f32.mrb[0].mxu0
  %v157 = vadd.f32 0.0, %v156
  %v158 = vpop.f32.mrb[0].mxu0
  %v159 = vadd.f32 0.0, %v158
  %160 = vmatprep.mubr.f32.mxu0 0.0
  %161 = vmatmul.mubr.f32.gmra.mrb[0].mxu0 %v43
  %v162 = vpop.f32.mrb[0].mxu0
  %v163 = vadd.f32 0.0, %v162
  %v164 = vpop.f32.mrb[0].mxu0
  %v165 = vadd.f32 0.0, %v164
  %166 = vmatprep.mubr.f32.mxu0 0.0
  %167 = vmatmul.mubr.f32.gmra.mrb[0].mxu0 %v46
  %v168 = vpop.f32.mrb[0].mxu0
  %v169 = vadd.f32 0.0, %v168
  %v170 = vpop.f32.mrb[0].mxu0
  %v171 = vadd.f32 0.0, %v170
  %172 = vmatprep.mubr.f32.mxu0 0.0
  %173 = vmatmul.mubr.f32.gmra.mrb[0].mxu0 %v49
  %v174 = vpop.f32.mrb[0].mxu0
  %v175 = vadd.f32 0.0, %v174
  %v176 = vpop.f32.mrb[0].mxu0
  %v177 = vadd.f32 0.0, %v176
  %178 = vmatprep.mubr.f32.mxu0 0.0
  %179 = vmatmul.mubr.f32.gmra.mrb[0].mxu0 %v52
  %v180 = vpop.f32.mrb[0].mxu0
  %v181 = vadd.f32 0.0, %v180
  %v182 = vpop.f32.mrb[0].mxu0
  %v183 = vadd.f32 0.0, %v182
  %184 = vmatprep.mubr.f32.mxu0 0.0
  %185 = vmatmul.mubr.f32.gmra.mrb[0].mxu0 %v55
  %v186 = vpop.f32.mrb[0].mxu0
  %v187 = vadd.f32 0.0, %v186
  %v188 = vpop.f32.mrb[0].mxu0
  %v189 = vadd.f32 0.0, %v188
  %190 = vmatprep.mubr.f32.mxu0 0.0
  %191 = vmatmul.mubr.f32.gmra.mrb[0].mxu0 %v58
  %v192 = vpop.f32.mrb[0].mxu0
  %v193 = vadd.f32 0.0, %v192
  %v194 = vpop.f32.mrb[0].mxu0
  %v195 = vadd.f32 0.0, %v194
  %196 = vmatprep.mubr.f32.mxu0 0.0
  %197 = vmatmul.mubr.f32.gmra.mrb[0].mxu0 %v61
  %v198 = vpop.f32.mrb[0].mxu0
  %v199 = vadd.f32 0.0, %v198
  %v200 = vpop.f32.mrb[0].mxu0
  %v201 = vadd.f32 0.0, %v200
  %202 = vmatprep.mubr.f32.mxu0 0.0
  %203 = vmatmul.mubr.f32.gmra.mrb[0].mxu0 %v64
  %v204 = vpop.f32.mrb[0].mxu0
  %v205 = vadd.f32 0.0, %v204
  %v206 = vpop.f32.mrb[0].mxu0
  %v207 = vadd.f32 0.0, %v206
  %208 = vmatprep.mubr.f32.mxu0 0.0
  %209 = vmatmul.mubr.f32.gmra.mrb[0].mxu0 %v67
  %v210 = vpop.f32.mrb[0].mxu0
  %v211 = vadd.f32 0.0, %v210
  %v212 = vpop.f32.mrb[0].mxu0
  %v213 = vadd.f32 0.0, %v212
  %214 = vmatprep.mubr.f32.mxu0 0.0
  %215 = vmatmul.mubr.f32.gmra.mrb[0].mxu0 %v70
  %v216 = vpop.f32.mrb[0].mxu0
  %v217 = vadd.f32 0.0, %v216
  %v218 = vpop.f32.mrb[0].mxu0
  %v219 = vadd.f32 0.0, %v218
  %220 = vmatprep.mubr.f32.mxu0 0.0
  %221 = vmatmul.mubr.f32.gmra.mrb[0].mxu0 %v73
  %v222 = vpop.f32.mrb[0].mxu0
  %v223 = vadd.f32 0.0, %v222
  %v224 = vpop.f32.mrb[0].mxu0
  %v225 = vadd.f32 0.0, %v224
  %226 = vmatprep.mubr.f32.mxu0 0.0
  %227 = vmatmul.mubr.f32.gmra.mrb[0].mxu0 %v76
  %v228 = vpop.f32.mrb[0].mxu0
  %v229 = vadd.f32 0.0, %v228
  %v230 = vpop.f32.mrb[0].mxu0
  %v231 = vadd.f32 0.0, %v230
  %232 = vmatprep.mubr.f32.mxu0 0.0
  %233 = vmatmul.mubr.f32.gmra.mrb[0].mxu0 %v79
  %v234 = vpop.f32.mrb[0].mxu0
  %v235 = vadd.f32 0.0, %v234
  %v236 = vpop.f32.mrb[0].mxu0
  %v237 = vadd.f32 0.0, %v236
  %238 = vmatprep.mubr.f32.mxu0 0.0
  %239 = vmatmul.mubr.f32.gmra.mrb[0].mxu0 %v82
  %v240 = vpop.f32.mrb[0].mxu0
  %v241 = vadd.f32 0.0, %v240
  %v242 = vpop.f32.mrb[0].mxu0
  %v243 = vadd.f32 0.0, %v242
  %244 = vdwg.mxu0
  %v245 = vmax.f32 %v151, 0.0
  %v246 = vmax.f32 %v153, 0.0
  %v247 = vmax.f32 %v157, 0.0
  %v248 = vmax.f32 %v159, 0.0
  %v249 = vmax.f32 %v163, 0.0
  %v250 = vmax.f32 %v165, 0.0
  %v251 = vmax.f32 %v169, 0.0
  %v252 = vmax.f32 %v171, 0.0
  %v253 = vmax.f32 %v175, 0.0
  %v254 = vmax.f32 %v177, 0.0
  %v255 = vmax.f32 %v181, 0.0
  %v256 = vmax.f32 %v183, 0.0
  %v257 = vmax.f32 %v187, 0.0
  %v258 = vmax.f32 %v189, 0.0
  %v259 = vmax.f32 %v193, 0.0
  %v260 = vmax.f32 %v195, 0.0
  %v261 = vmax.f32 %v199, 0.0
  %v262 = vmax.f32 %v201, 0.0
  %v263 = vmax.f32 %v205, 0.0
  %v264 = vmax.f32 %v207, 0.0
  %v265 = vmax.f32 %v211, 0.0
  %v266 = vmax.f32 %v213, 0.0
  %v267 = vmax.f32 %v217, 0.0
  %v268 = vmax.f32 %v219, 0.0
  %v269 = vmax.f32 %v223, 0.0
  %v270 = vmax.f32 %v225, 0.0
  %v271 = vmax.f32 %v229, 0.0
  %v272 = vmax.f32 %v231, 0.0
  %v273 = vmax.f32 %v235, 0.0
  %v274 = vmax.f32 %v237, 0.0
  %v275 = vmax.f32 %v241, 0.0
  %v276 = vmax.f32 %v243, 0.0
  %v277 = vld [vmem:[%s2] sm:$0xff]
  %v278 = vld [vmem:[%s2 + $0x8] sm:$0xff]
  %v279 = vld [vmem:[%s2 + $0x10] sm:$0xff]
  %v280 = vld [vmem:[%s2 + $0x18] sm:$0xff]
  %v281 = vld [vmem:[%s2 + $0x20] sm:$0xff]
  %v282 = vld [vmem:[%s2 + $0x28] sm:$0xff]
  %v283 = vld [vmem:[%s2 + $0x30] sm:$0xff]
  %v284 = vld [vmem:[%s2 + $0x38] sm:$0xff]
  %285 = vmatprep.subr.mxu0 %v246
  %286 = vmatpush1.msra.mxu0 %v245
  %287 = vmatprep.subr.mxu0 %v248
  %288 = vmatpush1.msra.mxu0 %v247
  %289 = vmatprep.subr.mxu0 %v250
  %290 = vmatpush1.msra.mxu0 %v249
  %291 = vmatprep.subr.mxu0 %v252
  %292 = vmatpush1.msra.mxu0 %v251
  %293 = vmatprep.subr.mxu0 %v254
  %294 = vmatpush1.msra.mxu0 %v253
  %295 = vmatprep.subr.mxu0 %v256
  %296 = vmatpush1.msra.mxu0 %v255
  %297 = vmatprep.subr.mxu0 %v258
  %298 = vmatpush1.msra.mxu0 %v257
  %299 = vmatprep.subr.mxu0 %v260
  %300 = vmatpush1.msra.mxu0 %v259
  %301 = vmatprep.subr.mxu0 %v262
  %302 = vmatpush1.msra.mxu0 %v261
  %303 = vmatprep.subr.mxu0 %v264
  %304 = vmatpush1.msra.mxu0 %v263
  %305 = vmatprep.subr.mxu0 %v266
  %306 = vmatpush1.msra.mxu0 %v265
  %307 = vmatprep.subr.mxu0 %v268
  %308 = vmatpush1.msra.mxu0 %v267
  %309 = vmatprep.subr.mxu0 %v270
  %310 = vmatpush1.msra.mxu0 %v269
  %311 = vmatprep.subr.mxu0 %v272
  %312 = vmatpush1.msra.mxu0 %v271
  %313 = vmatprep.subr.mxu0 %v274
  %314 = vmatpush1.msra.mxu0 %v273
  %315 = vmatprep.subr.mxu0 %v276
  %316 = vmatpush1.msra.mxu0 %v275
  %317 = vmatprep.subr.mxu0 0.0
  %318 = vmatpush1.msra.mxu0 0.0
  %319 = vmatprep.subr.mxu0 0.0
  %320 = vmatpush1.msra.mxu0 0.0
  %321 = vmatprep.subr.mxu0 0.0
  %322 = vmatpush1.msra.mxu0 0.0
  %323 = vmatprep.subr.mxu0 0.0
  %324 = vmatpush1.msra.mxu0 0.0
  %325 = vmatprep.subr.mxu0 0.0
  %326 = vmatpush1.msra.mxu0 0.0
  %327 = vmatprep.subr.mxu0 0.0
  %328 = vmatpush1.msra.mxu0 0.0
  %329 = vmatprep.subr.mxu0 0.0
  %330 = vmatpush1.msra.mxu0 0.0
  %331 = vmatprep.subr.mxu0 0.0
  %332 = vmatpush1.msra.mxu0 0.0
  %333 = vmatprep.subr.mxu0 0.0
  %334 = vmatpush1.msra.mxu0 0.0
  %335 = vmatprep.subr.mxu0 0.0
  %336 = vmatpush1.msra.mxu0 0.0
  %337 = vmatprep.subr.mxu0 0.0
  %338 = vmatpush1.msra.mxu0 0.0
  %339 = vmatprep.subr.mxu0 0.0
  %340 = vmatpush1.msra.mxu0 0.0
  %341 = vmatprep.subr.mxu0 0.0
  %342 = vmatpush1.msra.mxu0 0.0
  %343 = vmatprep.subr.mxu0 0.0
  %344 = vmatpush1.msra.mxu0 0.0
  %345 = vmatprep.subr.mxu0 0.0
  %346 = vmatpush1.msra.mxu0 0.0
  %347 = vmatprep.subr.mxu0 0.0
  %348 = vmatpush1.msra.mxu0 0.0
  %349 = vmatprep.mubr.f32.mxu0 0.0
  %350 = vmatmul.mubr.f32.gmra.mrb[0].mxu0 %v277
  %v351 = vpop.f32.mrb[0].mxu0
  %v352 = vadd.f32 0.0, %v351
  %v353 = vpop.f32.mrb[0].mxu0
  %v354 = vadd.f32 0.0, %v353
  %355 = vmatprep.mubr.f32.mxu0 0.0
  %356 = vmatmul.mubr.f32.gmra.mrb[0].mxu0 %v278
  %v357 = vpop.f32.mrb[0].mxu0
  %v358 = vadd.f32 0.0, %v357
  %v359 = vpop.f32.mrb[0].mxu0
  %v360 = vadd.f32 0.0, %v359
  %361 = vmatprep.mubr.f32.mxu0 0.0
  %362 = vmatmul.mubr.f32.gmra.mrb[0].mxu0 %v279
  %v363 = vpop.f32.mrb[0].mxu0
  %v364 = vadd.f32 0.0, %v363
  %v365 = vpop.f32.mrb[0].mxu0
  %v366 = vadd.f32 0.0, %v365
  %367 = vmatprep.mubr.f32.mxu0 0.0
  %368 = vmatmul.mubr.f32.gmra.mrb[0].mxu0 %v280
  %v369 = vpop.f32.mrb[0].mxu0
  %v370 = vadd.f32 0.0, %v369
  %v371 = vpop.f32.mrb[0].mxu0
  %v372 = vadd.f32 0.0, %v371
  %373 = vmatprep.mubr.f32.mxu0 0.0
  %374 = vmatmul.mubr.f32.gmra.mrb[0].mxu0 %v281
  %v375 = vpop.f32.mrb[0].mxu0
  %v376 = vadd.f32 0.0, %v375
  %v377 = vpop.f32.mrb[0].mxu0
  %v378 = vadd.f32 0.0, %v377
  %379 = vmatprep.mubr.f32.mxu0 0.0
  %380 = vmatmul.mubr.f32.gmra.mrb[0].mxu0 %v282
  %v381 = vpop.f32.mrb[0].mxu0
  %v382 = vadd.f32 0.0, %v381
  %v383 = vpop.f32.mrb[0].mxu0
  %v384 = vadd.f32 0.0, %v383
  %385 = vmatprep.mubr.f32.mxu0 0.0
  %386 = vmatmul.mubr.f32.gmra.mrb[0].mxu0 %v283
  %v387 = vpop.f32.mrb[0].mxu0
  %v388 = vadd.f32 0.0, %v387
  %v389 = vpop.f32.mrb[0].mxu0
  %v390 = vadd.f32 0.0, %v389
  %391 = vmatprep.mubr.f32.mxu0 0.0
  %392 = vmatmul.mubr.f32.gmra.mrb[0].mxu0 %v284
  %v393 = vpop.f32.mrb[0].mxu0
  %v394 = vadd.f32 0.0, %v393
  %v395 = vpop.f32.mrb[0].mxu0
  %v396 = vadd.f32 0.0, %v395
  %397 = vdwg.mxu0
  %v398 = vmax.f32 %v352, 0.0
  %v399 = vmax.f32 %v354, 0.0
  %v400 = vmax.f32 %v358, 0.0
  %v401 = vmax.f32 %v360, 0.0
  %v402 = vmax.f32 %v364, 0.0
  %v403 = vmax.f32 %v366, 0.0
  %v404 = vmax.f32 %v370, 0.0
  %v405 = vmax.f32 %v372, 0.0
  %v406 = vmax.f32 %v376, 0.0
  %v407 = vmax.f32 %v378, 0.0
  %v408 = vmax.f32 %v382, 0.0
  %v409 = vmax.f32 %v384, 0.0
  %v410 = vmax.f32 %v388, 0.0
  %v411 = vmax.f32 %v390, 0.0
  %v412 = vmax.f32 %v394, 0.0
  %v413 = vmax.f32 %v396, 0.0
  %v414 = vld [vmem:[%s3] sm:$0xff]
  %vm415 = vcmask 523264
  %v417 = vsel %vm415, %v414, 0
  %419 = vmatprep.subr.mxu0 %v399
  %420 = vmatpush1.msra.mxu0 %v398
  %421 = vmatprep.subr.mxu0 %v401
  %422 = vmatpush1.msra.mxu0 %v400
  %423 = vmatprep.subr.mxu0 %v403
  %424 = vmatpush1.msra.mxu0 %v402
  %425 = vmatprep.subr.mxu0 %v405
  %426 = vmatpush1.msra.mxu0 %v404
  %427 = vmatprep.subr.mxu0 %v407
  %428 = vmatpush1.msra.mxu0 %v406
  %429 = vmatprep.subr.mxu0 %v409
  %430 = vmatpush1.msra.mxu0 %v408
  %431 = vmatprep.subr.mxu0 %v411
  %432 = vmatpush1.msra.mxu0 %v410
  %433 = vmatprep.subr.mxu0 %v413
  %434 = vmatpush1.msra.mxu0 %v412
  %435 = vmatprep.subr.mxu0 0.0
  %436 = vmatpush1.msra.mxu0 0.0
  %437 = vmatprep.subr.mxu0 0.0
  %438 = vmatpush1.msra.mxu0 0.0
  %439 = vmatprep.subr.mxu0 0.0
  %440 = vmatpush1.msra.mxu0 0.0
  %441 = vmatprep.subr.mxu0 0.0
  %442 = vmatpush1.msra.mxu0 0.0
  %443 = vmatprep.subr.mxu0 0.0
  %444 = vmatpush1.msra.mxu0 0.0
  %445 = vmatprep.subr.mxu0 0.0
  %446 = vmatpush1.msra.mxu0 0.0
  %447 = vmatprep.subr.mxu0 0.0
  %448 = vmatpush1.msra.mxu0 0.0
  %449 = vmatprep.subr.mxu0 0.0
  %450 = vmatpush1.msra.mxu0 0.0
  %451 = vmatprep.subr.mxu0 0.0
  %452 = vmatpush1.msra.mxu0 0.0
  %453 = vmatprep.subr.mxu0 0.0
  %454 = vmatpush1.msra.mxu0 0.0
  %455 = vmatprep.subr.mxu0 0.0
  %456 = vmatpush1.msra.mxu0 0.0
  %457 = vmatprep.subr.mxu0 0.0
  %458 = vmatpush1.msra.mxu0 0.0
  %459 = vmatprep.subr.mxu0 0.0
  %460 = vmatpush1.msra.mxu0 0.0
  %461 = vmatprep.subr.mxu0 0.0
  %462 = vmatpush1.msra.mxu0 0.0
  %463 = vmatprep.subr.mxu0 0.0
  %464 = vmatpush1.msra.mxu0 0.0
  %465 = vmatprep.subr.mxu0 0.0
  %466 = vmatpush1.msra.mxu0 0.0
  %467 = vmatprep.subr.mxu0 0.0
  %468 = vmatpush1.msra.mxu0 0.0
  %469 = vmatprep.subr.mxu0 0.0
  %470 = vmatpush1.msra.mxu0 0.0
  %471 = vmatprep.subr.mxu0 0.0
  %472 = vmatpush1.msra.mxu0 0.0
  %473 = vmatprep.subr.mxu0 0.0
  %474 = vmatpush1.msra.mxu0 0.0
  %475 = vmatprep.subr.mxu0 0.0
  %476 = vmatpush1.msra.mxu0 0.0
  %477 = vmatprep.subr.mxu0 0.0
  %478 = vmatpush1.msra.mxu0 0.0
  %479 = vmatprep.subr.mxu0 0.0
  %480 = vmatpush1.msra.mxu0 0.0
  %481 = vmatprep.subr.mxu0 0.0
  %482 = vmatpush1.msra.mxu0 0.0
  %483 = vmatprep.mubr.f32.mxu0 0.0
  %484 = vmatmul.mubr.f32.gmra.mrb[0].mxu0 %v417
  %v485 = vpop.f32.mrb[0].mxu0
  %v486 = vadd.f32 0.0, %v485
  %v487 = vpop.f32.mrb[0].mxu0
  %v488 = vadd.f32 0.0, %v487
  %489 = vdwg.mxu0
  %v490 = vtanh.pop %v486
  %v491 = vtanh.pop %v488
  %v494 = vcombine.low %v490, %v491
  %v496 = vunpack.c.l.s4 1983009808
  %v497 = vunpack.c.0.s8 %v496
  %v498 = vlaneseq
  %v499 = vshrl.u32 %v498, 7
  %v500 = vsub.s32 %v497, %v499
  %v501 = vrot.slane %v494, %v500
  %503 = vst [vmem:[%s4] sm:$0xf] %v501
  // Predicated region
  $region18: #{conditional_normal_forward.1} parent=0 // pred_check
    _
  $region19: #{conditional_normal_forward.1} parent=0 // pred_check_branch
    %505 = sbr.rel (0) target = $region21
  $region20: #{conditional_normal_forward.1} parent=0 // pred_region
    _
  $region21: #{conditional_normal_forward.1} parent=0 // pred_fallthru
    _
  // Predicated region
  $region22: #{conditional_normal_forward.1} parent=0 // pred_check
    _
  $region23: #{conditional_normal_forward.1} parent=0 // pred_check_branch
    %507 = sbr.rel (0) target = $region25
  $region24: #{conditional_normal_forward.1} parent=0 // pred_region
    _
  $region25: #{conditional_normal_forward.1} parent=0 // pred_fallthru
    _

</llo_original>
